<compile_context>
chip_gen: v7x
topology: tpu7x:2x2x1
jax: 0.10.0
libtpu: 0.0.40
codegen_flags: <defaults>
</compile_context>

<pallas_src>
import functools

import jax
import jax.numpy as jnp
from jax.experimental import pallas as pl
from jax.experimental.pallas import tpu as pltpu


def _round_up(v, m):
    return ((v + m - 1) // m) * m


# ----------------------------------------------------------------------------
# Fused conv + BN + norm-ReLU kernel.
# grid = (T,):  each step contracts one N-tile into the (B, R*c_in) accumulator;
#               the last step runs the batch-norm / norm-nonlinearity head.
# ----------------------------------------------------------------------------
def conv_head_kernel(coords_t_ref, x_ref, bid_row_ref, pos_ref, mu_ref,
                     w_ref, gamma_ref, beta_ref, nbias_ref, out_ref,
                     s_scr, *, B, R, c_in, inv_two_sigma2, eps):
    t = pl.program_id(0)
    n_tiles = pl.num_programs(0)

    @pl.when(t == 0)
    def _init():
        s_scr[...] = jnp.zeros_like(s_scr)

    coords_t = coords_t_ref[...]                                   # (3, Nt) f32, N on lanes
    n_tile = coords_t.shape[1]
    bid_row = bid_row_ref[...]                                     # (1, Nt) int32, pad = -1

    # Single lane-dense one-hot, reused for the centroid gather and the masked basis.
    gid = jax.lax.broadcasted_iota(jnp.int32, (B, n_tile), 0)
    onehot_bn = (gid == bid_row).astype(jnp.float32)               # (B, Nt)

    # Each point's own graph centroid: (3, B) @ (B, Nt) -> (3, Nt)   (small MXU push)
    pos_pt = jnp.dot(pos_ref[...], onehot_bn,
                     preferred_element_type=jnp.float32)
    delta = coords_t - pos_pt                                      # (3, Nt)
    dist = jnp.sqrt(jnp.sum(delta * delta, axis=0, keepdims=True))  # (1, Nt)

    # Radial Gaussian-ring basis: one exp per (ring, point) on the EUP.
    g = jnp.exp(-((dist - mu_ref[...]) ** 2) * inv_two_sigma2)     # (R, Nt) f32

    # Per-ring MXU contraction over the only large dim (N); bf16 operands, f32 accumulate.
    x_bf = x_ref[...]                                              # (Nt, c_in) bf16
    parts = []
    for r in range(R):                                             # R is small & static
        lhs = (g[r:r + 1, :] * onehot_bn).astype(jnp.bfloat16)     # (B, Nt)
        parts.append(jnp.dot(lhs, x_bf,
                             preferred_element_type=jnp.float32))  # (B, c_in) f32
    # One wide (B, R*c_in) accumulator update (no (R*B, Nt) G, no sublane concatenate).
    s_scr[...] += jnp.concatenate(parts, axis=1)

    @pl.when(t == n_tiles - 1)
    def _finalize():
        # Conv weights: single (B, R*c_in) @ (R*c_in, c_pad) matmul.
        y = jnp.dot(s_scr[...], w_ref[...],
                    preferred_element_type=jnp.float32)            # (B, c_pad)
        # IIDBatchNorm3d (trivial fields, batch statistics) + NormNonLinearity + NormPool.
        mean = jnp.mean(y, axis=0, keepdims=True)
        var = jnp.mean((y - mean) ** 2, axis=0, keepdims=True)
        yn = (y - mean) * jax.lax.rsqrt(var + eps)
        yn = yn * gamma_ref[...] + beta_ref[...]
        out_ref[...] = jnp.maximum(jnp.abs(yn) + nbias_ref[...], 0.0)


# ----------------------------------------------------------------------------
# Wrapper
# ----------------------------------------------------------------------------
def global_equivariant_setup_abstraction(x, coords, batch, num_graphs, params,
                                         n_tile=2048):
    """Returns (out, batch_index) like the PyTorch module ('Norm' branch)."""
    N, c_in = x.shape
    B = int(num_graphs)
    mu = params["mu"].reshape(-1)                 # (R,)
    R = int(mu.shape[0])
    w_flat = params["w"]                          # (R*C_in, C_out), rows = r*C_in + ci
    c_out = int(w_flat.shape[1])
    sigma = float(params["sigma"])
    inv2s2 = 1.0 / (2.0 * sigma * sigma)
    eps = 1e-5

    # --- centroids (global_mean_pool): tiny (3,B) result, computed outside the kernel
    #     (review item 8: drops the second grid phase + duplicate coords/bid streams). ---
    batch_i32 = batch.astype(jnp.int32)
    onehot_nb = (batch_i32[:, None] ==
                 jnp.arange(B, dtype=jnp.int32)[None, :]).astype(jnp.float32)   # (N, B)
    cnt = jnp.maximum(jnp.sum(onehot_nb, axis=0), 1.0)                           # (B,)
    pos_t = (coords.astype(jnp.float32).T @ onehot_nb) / cnt[None, :]            # (3, B)

    # --- lane-dense output slab: pad channel axis to a multiple of 128. ---
    c_pad = _round_up(c_out, 128)
    pad_c = c_pad - c_out
    w_p = jnp.pad(w_flat.astype(jnp.float32), ((0, 0), (0, pad_c)))
    gamma_p = jnp.pad(params["gamma"].astype(jnp.float32), ((0, 0), (0, pad_c)))
    beta_p = jnp.pad(params["beta"].astype(jnp.float32), ((0, 0), (0, pad_c)))
    nbias_p = jnp.pad(params["nbias"].astype(jnp.float32), ((0, 0), (0, pad_c)))

    # --- point-stream tiling: N on lanes for the basis math, N on sublanes for x
    #     (MXU RHS).  Tail masked via an out-of-range batch id (-1 matches no graph).
    #     n_tile default 2048 (sweep 2048-4096); per-tile buffers double-buffered stay
    #     ~1-2 MiB even with the (n_tile, c_in)->128-lane VMEM padding of x (bf16). ---
    n_tile = max(128, min(n_tile, _round_up(N, 128)))
    n_pad = _round_up(N, n_tile)
    pad_n = n_pad - N
    coords_t = jnp.pad(coords.astype(jnp.float32), ((0, pad_n), (0, 0))).T      # (3, n_pad)
    x_p = jnp.pad(x, ((0, pad_n), (0, 0))).astype(jnp.bfloat16)                 # (n_pad, c_in)
    bid_row = jnp.pad(batch_i32, (0, pad_n), constant_values=-1).reshape(1, n_pad)
    mu_col = mu.astype(jnp.float32).reshape(R, 1)

    n_tiles = n_pad // n_tile
    kernel = functools.partial(conv_head_kernel, B=B, R=R, c_in=c_in,
                               inv_two_sigma2=inv2s2, eps=eps)

    out_p = pl.pallas_call(
        kernel,
        out_shape=jax.ShapeDtypeStruct((B, c_pad), jnp.float32),
        grid_spec=pltpu.PrefetchScalarGridSpec(
            num_scalar_prefetch=0,
            grid=(n_tiles,),
            in_specs=[
                pl.BlockSpec((3, n_tile), lambda t: (0, t)),            # coords (N on lanes)
                pl.BlockSpec((n_tile, c_in), lambda t: (t, 0)),         # x (bf16, MXU RHS)
                pl.BlockSpec((1, n_tile), lambda t: (0, t)),            # batch ids (row)
                pl.BlockSpec((3, B), lambda t: (0, 0)),                 # centroids
                pl.BlockSpec((R, 1), lambda t: (0, 0)),                 # ring centers
                pl.BlockSpec((R * c_in, c_pad), lambda t: (0, 0)),      # conv weights
                pl.BlockSpec((1, c_pad), lambda t: (0, 0)),             # gamma
                pl.BlockSpec((1, c_pad), lambda t: (0, 0)),             # beta
                pl.BlockSpec((1, c_pad), lambda t: (0, 0)),             # norm bias
            ],
            out_specs=pl.BlockSpec((B, c_pad), lambda t: (0, 0)),
            scratch_shapes=[
                pltpu.VMEM((B, R * c_in), jnp.float32),                 # conv accumulator
            ]),
        compiler_params=pltpu.CompilerParams(
            # sequential accumulator across N tiles -> must stay "arbitrary"
            dimension_semantics=("arbitrary",),
            vmem_limit_bytes=32 * 1024 * 1024),
    )(coords_t, x_p, bid_row, pos_t, mu_col, w_p, gamma_p, beta_p, nbias_p)

    out = out_p[:, :c_out]
    return out, jnp.arange(B, dtype=jnp.int32)


# ----------------------------------------------------------------------------
# Pure-JAX reference (mirrors the kernel's bf16 MXU operands, f32 accumulate)
# ----------------------------------------------------------------------------
def _reference(x, coords, batch, B, mu, w_flat, gamma, beta, nbias, sigma, eps=1e-5):
    R = mu.shape[1]
    x_bf = x.astype(jnp.bfloat16).astype(jnp.float32)
    rows = []
    for b in range(B):
        mask = (batch == b).astype(jnp.float32)[:, None]
        cnt = jnp.maximum(mask.sum(), 1.0)
        pos = (coords * mask).sum(0, keepdims=True) / cnt
        d = jnp.sqrt(((coords - pos) ** 2).sum(-1, keepdims=True))
        g = jnp.exp(-((d - mu) ** 2) / (2.0 * sigma * sigma)) * mask
        g = g.astype(jnp.bfloat16).astype(jnp.float32)
        h = jnp.concatenate([g[:, r:r + 1] * x_bf for r in range(R)], axis=-1)
        rows.append(h.sum(0, keepdims=True) @ w_flat)
    y = jnp.concatenate(rows, axis=0)
    mean = y.mean(0, keepdims=True)
    var = ((y - mean) ** 2).mean(0, keepdims=True)
    yn = (y - mean) / jnp.sqrt(var + eps) * gamma + beta
    return jnp.maximum(jnp.abs(yn) + nbias, 0.0)


if __name__ == "__main__":
    # Small shapes: params = (channel, freq, width, n_rings, N_grid)
    N = 64          # number of points
    B = 2           # number of graphs in the batch
    C_IN = 4        # in_type size (trivial fields)
    CHANNEL = 8     # activation.in_type size = C_OUT for the 'Norm' branch
    R = 3           # n_rings
    WIDTH = 2.0
    SIGMA = WIDTH / R

    key = jax.random.PRNGKey(0)
    k_x, k_c, k_w, k_g, k_b, k_n = jax.random.split(key, 6)

    x = jax.random.normal(k_x, (N, C_IN), dtype=jnp.float32)
    coords = jax.random.normal(k_c, (N, 3), dtype=jnp.float32)
    batch = jnp.concatenate(
        [jnp.zeros(N // 2, jnp.int32), jnp.ones(N - N // 2, jnp.int32)])

    params = {
        "mu": jnp.linspace(0.0, WIDTH, R, dtype=jnp.float32).reshape(1, R),
        "sigma": SIGMA,
        "w": 0.1 * jax.random.normal(k_w, (R * C_IN, CHANNEL), dtype=jnp.float32),
        "gamma": 1.0 + 0.1 * jax.random.normal(k_g, (1, CHANNEL), dtype=jnp.float32),
        "beta": 0.1 * jax.random.normal(k_b, (1, CHANNEL), dtype=jnp.float32),
        "nbias": 0.1 * jax.random.normal(k_n, (1, CHANNEL), dtype=jnp.float32),
    }

    out, batch_idx = global_equivariant_setup_abstraction(x, coords, batch, B, params)
    out = jax.block_until_ready(out)

    ref = _reference(x, coords, batch, B, params["mu"], params["w"],
                     params["gamma"], params["beta"], params["nbias"], SIGMA)
    assert out.shape == (B, CHANNEL)
    assert batch_idx.shape == (B,)
    assert jnp.allclose(out, ref, rtol=1e-2, atol=1e-2), "mismatch vs reference"

    print("KERNEL_OK")
</pallas_src>

<mosaic_0001>
module attributes {stable_mosaic.version = 11 : i64} {
  func.func @conv_head_kernel(%arg0: i32, %arg1: memref<3x128xf32, #tpu.memory_space<vmem>>, %arg2: memref<128x4xbf16, #tpu.memory_space<vmem>>, %arg3: memref<1x128xi32, #tpu.memory_space<vmem>>, %arg4: memref<3x2xf32, #tpu.memory_space<vmem>>, %arg5: memref<3x1xf32, #tpu.memory_space<vmem>>, %arg6: memref<12x128xf32, #tpu.memory_space<vmem>>, %arg7: memref<1x128xf32, #tpu.memory_space<vmem>>, %arg8: memref<1x128xf32, #tpu.memory_space<vmem>>, %arg9: memref<1x128xf32, #tpu.memory_space<vmem>>, %arg10: memref<2x128xf32, #tpu.memory_space<vmem>>, %arg11: memref<2x12xf32, #tpu.memory_space<vmem>>) attributes {dimension_semantics = [#tpu.dimension_semantics<arbitrary>], iteration_bounds = array<i64: 1>, scalar_prefetch = 0 : i64, scratch_operands = 1 : i64, tpu.core_type = #tpu.core_type<tc>, window_params = [{transform_indices = @transform_0, window_bounds = array<i64: 3, 128>}, {transform_indices = @transform_1, window_bounds = array<i64: 128, 4>}, {transform_indices = @transform_2, window_bounds = array<i64: 1, 128>}, {pipeline_mode = #tpu.pipeline_mode<synchronous>, transform_indices = @transform_3, window_bounds = array<i64: 3, 2>}, {pipeline_mode = #tpu.pipeline_mode<synchronous>, transform_indices = @transform_4, window_bounds = array<i64: 3, 1>}, {pipeline_mode = #tpu.pipeline_mode<synchronous>, transform_indices = @transform_5, window_bounds = array<i64: 12, 128>}, {pipeline_mode = #tpu.pipeline_mode<synchronous>, transform_indices = @transform_6, window_bounds = array<i64: 1, 128>}, {pipeline_mode = #tpu.pipeline_mode<synchronous>, transform_indices = @transform_7, window_bounds = array<i64: 1, 128>}, {pipeline_mode = #tpu.pipeline_mode<synchronous>, transform_indices = @transform_8, window_bounds = array<i64: 1, 128>}, {pipeline_mode = #tpu.pipeline_mode<synchronous>, transform_indices = @transform_9, window_bounds = array<i64: 2, 128>}]} {
    %c0_i32 = arith.constant 0 : i32
    %0 = arith.cmpi eq, %arg0, %c0_i32 : i32
    %1 = arith.extui %0 : i1 to i32
    %c0_i32_0 = arith.constant 0 : i32
    %2 = arith.cmpi ne, %1, %c0_i32_0 : i32
    scf.if %2 {
      %cst_22 = arith.constant 0.000000e+00 : f32
      %50 = vector.broadcast %cst_22 : f32 to vector<2x12xf32>
      %c0_23 = arith.constant 0 : index
      %c0_24 = arith.constant 0 : index
      %51 = vector.load %arg11[%c0_23, %c0_24] : memref<2x12xf32, #tpu.memory_space<vmem>>, vector<2x12xf32>
      tpu.vector_store %arg11[%c0_23, %c0_24], %50 {strides = array<i32>} : memref<2x12xf32, #tpu.memory_space<vmem>>, vector<2x12xf32>,
    } else {
    }
    %c0 = arith.constant 0 : index
    %c0_1 = arith.constant 0 : index
    %3 = vector.load %arg1[%c0, %c0_1] : memref<3x128xf32, #tpu.memory_space<vmem>>, vector<3x128xf32>
    %c0_2 = arith.constant 0 : index
    %c0_3 = arith.constant 0 : index
    %4 = vector.load %arg3[%c0_2, %c0_3] : memref<1x128xi32, #tpu.memory_space<vmem>>, vector<1x128xi32>
    %5 = tpu.iota {dimensions = array<i32: 0>} : vector<2x128xi32>
    %6 = vector.broadcast %4 : vector<1x128xi32> to vector<2x128xi32>
    %7 = arith.cmpi eq, %5, %6 : vector<2x128xi32>
    %8 = arith.extui %7 : vector<2x128xi1> to vector<2x128xi32>
    %9 = arith.sitofp %8 : vector<2x128xi32> to vector<2x128xf32>
    %c0_4 = arith.constant 0 : index
    %c0_5 = arith.constant 0 : index
    %10 = vector.load %arg4[%c0_4, %c0_5] : memref<3x2xf32, #tpu.memory_space<vmem>>, vector<3x2xf32>
    %cst = arith.constant dense<0.000000e+00> : vector<3x128xf32>
    %11 = tpu.matmul %10, %9, %cst {dimension_numbers = #tpu.dot_dimension_numbers<[1], [0], [0], [1], [0, 0, 1, 1], [], []>} : vector<3x2xf32>, vector<2x128xf32>, vector<3x128xf32> -> vector<3x128xf32>
    %12 = arith.subf %3, %11 : vector<3x128xf32>
    %13 = arith.mulf %12, %12 : vector<3x128xf32>
    %cst_6 = arith.constant dense<0.000000e+00> : vector<128xf32>
    %14 = vector.multi_reduction <add>, %13, %cst_6 [0] : vector<3x128xf32> to vector<128xf32>
    %15 = vector.shape_cast %14 : vector<128xf32> to vector<1x128xf32>
    %16 = math.sqrt %15 : vector<1x128xf32>
    %c0_7 = arith.constant 0 : index
    %c0_8 = arith.constant 0 : index
    %17 = vector.load %arg5[%c0_7, %c0_8] : memref<3x1xf32, #tpu.memory_space<vmem>>, vector<3x1xf32>
    %18 = vector.broadcast %16 : vector<1x128xf32> to vector<3x128xf32>
    %19 = vector.broadcast %17 : vector<3x1xf32> to vector<3x128xf32>
    %20 = arith.subf %18, %19 : vector<3x128xf32>
    %21 = arith.mulf %20, %20 : vector<3x128xf32>
    %cst_9 = arith.constant 0.000000e+00 : f32
    %22 = vector.broadcast %cst_9 : f32 to vector<3x128xf32>
    %23 = arith.subf %22, %21 : vector<3x128xf32>
    %cst_10 = arith.constant 1.125000e+00 : f32
    %24 = vector.broadcast %cst_10 : f32 to vector<3x128xf32>
    %25 = arith.mulf %23, %24 : vector<3x128xf32>
    %26 = math.exp %25 : vector<3x128xf32>
    %c0_11 = arith.constant 0 : index
    %c0_12 = arith.constant 0 : index
    %27 = vector.load %arg2[%c0_11, %c0_12] : memref<128x4xbf16, #tpu.memory_space<vmem>>, vector<128x4xbf16>
    %28 = vector.extract_strided_slice %26 {offsets = [0, 0], sizes = [1, 128], strides = [1, 1]} : vector<3x128xf32> to vector<1x128xf32>
    %29 = vector.broadcast %28 : vector<1x128xf32> to vector<2x128xf32>
    %30 = arith.mulf %29, %9 : vector<2x128xf32>
    %31 = arith.truncf %30 : vector<2x128xf32> to vector<2x128xbf16>
    %cst_13 = arith.constant dense<0.000000e+00> : vector<2x4xf32>
    %32 = tpu.matmul %31, %27, %cst_13 {dimension_numbers = #tpu.dot_dimension_numbers<[1], [0], [0], [1], [0, 0, 1, 1], [], []>} : vector<2x128xbf16>, vector<128x4xbf16>, vector<2x4xf32> -> vector<2x4xf32>
    %33 = vector.extract_strided_slice %26 {offsets = [1, 0], sizes = [1, 128], strides = [1, 1]} : vector<3x128xf32> to vector<1x128xf32>
    %34 = vector.broadcast %33 : vector<1x128xf32> to vector<2x128xf32>
    %35 = arith.mulf %34, %9 : vector<2x128xf32>
    %36 = arith.truncf %35 : vector<2x128xf32> to vector<2x128xbf16>
    %cst_14 = arith.constant dense<0.000000e+00> : vector<2x4xf32>
    %37 = tpu.matmul %36, %27, %cst_14 {dimension_numbers = #tpu.dot_dimension_numbers<[1], [0], [0], [1], [0, 0, 1, 1], [], []>} : vector<2x128xbf16>, vector<128x4xbf16>, vector<2x4xf32> -> vector<2x4xf32>
    %38 = vector.extract_strided_slice %26 {offsets = [2, 0], sizes = [1, 128], strides = [1, 1]} : vector<3x128xf32> to vector<1x128xf32>
    %39 = vector.broadcast %38 : vector<1x128xf32> to vector<2x128xf32>
    %40 = arith.mulf %39, %9 : vector<2x128xf32>
    %41 = arith.truncf %40 : vector<2x128xf32> to vector<2x128xbf16>
    %cst_15 = arith.constant dense<0.000000e+00> : vector<2x4xf32>
    %42 = tpu.matmul %41, %27, %cst_15 {dimension_numbers = #tpu.dot_dimension_numbers<[1], [0], [0], [1], [0, 0, 1, 1], [], []>} : vector<2x128xbf16>, vector<128x4xbf16>, vector<2x4xf32> -> vector<2x4xf32>
    %c0_16 = arith.constant 0 : index
    %c0_17 = arith.constant 0 : index
    %43 = vector.load %arg11[%c0_16, %c0_17] : memref<2x12xf32, #tpu.memory_space<vmem>>, vector<2x12xf32>
    %44 = tpu.concatenate %32, %37, %42 in 1 : vector<2x4xf32>, vector<2x4xf32>, vector<2x4xf32> -> vector<2x12xf32>
    %45 = arith.addf %43, %44 : vector<2x12xf32>
    %c0_18 = arith.constant 0 : index
    %c0_19 = arith.constant 0 : index
    %46 = vector.load %arg11[%c0_18, %c0_19] : memref<2x12xf32, #tpu.memory_space<vmem>>, vector<2x12xf32>
    tpu.vector_store %arg11[%c0_18, %c0_19], %45 {strides = array<i32>} : memref<2x12xf32, #tpu.memory_space<vmem>>, vector<2x12xf32>,
    %c0_i32_20 = arith.constant 0 : i32
    %47 = arith.cmpi eq, %arg0, %c0_i32_20 : i32
    %48 = arith.extui %47 : i1 to i32
    %c0_i32_21 = arith.constant 0 : i32
    %49 = arith.cmpi ne, %48, %c0_i32_21 : i32
    scf.if %49 {
      %c0_22 = arith.constant 0 : index
      %c0_23 = arith.constant 0 : index
      %50 = vector.load %arg11[%c0_22, %c0_23] : memref<2x12xf32, #tpu.memory_space<vmem>>, vector<2x12xf32>
      %c0_24 = arith.constant 0 : index
      %c0_25 = arith.constant 0 : index
      %51 = vector.load %arg6[%c0_24, %c0_25] : memref<12x128xf32, #tpu.memory_space<vmem>>, vector<12x128xf32>
      %cst_26 = arith.constant dense<0.000000e+00> : vector<2x128xf32>
      %52 = tpu.matmul %50, %51, %cst_26 {dimension_numbers = #tpu.dot_dimension_numbers<[1], [0], [0], [1], [0, 0, 1, 1], [], []>} : vector<2x12xf32>, vector<12x128xf32>, vector<2x128xf32> -> vector<2x128xf32>
      %cst_27 = arith.constant dense<0.000000e+00> : vector<128xf32>
      %53 = vector.multi_reduction <add>, %52, %cst_27 [0] : vector<2x128xf32> to vector<128xf32>
      %54 = vector.shape_cast %53 : vector<128xf32> to vector<1x128xf32>
      %cst_28 = arith.constant 2.000000e+00 : f32
      %55 = vector.broadcast %cst_28 : f32 to vector<1x128xf32>
      %56 = arith.divf %54, %55 : vector<1x128xf32>
      %57 = vector.broadcast %56 : vector<1x128xf32> to vector<2x128xf32>
      %58 = arith.subf %52, %57 : vector<2x128xf32>
      %59 = arith.mulf %58, %58 : vector<2x128xf32>
      %cst_29 = arith.constant dense<0.000000e+00> : vector<128xf32>
      %60 = vector.multi_reduction <add>, %59, %cst_29 [0] : vector<2x128xf32> to vector<128xf32>
      %61 = vector.shape_cast %60 : vector<128xf32> to vector<1x128xf32>
      %cst_30 = arith.constant 2.000000e+00 : f32
      %62 = vector.broadcast %cst_30 : f32 to vector<1x128xf32>
      %63 = arith.divf %61, %62 : vector<1x128xf32>
      %64 = vector.broadcast %56 : vector<1x128xf32> to vector<2x128xf32>
      %65 = arith.subf %52, %64 : vector<2x128xf32>
      %cst_31 = arith.constant 9.99999974E-6 : f32
      %66 = vector.broadcast %cst_31 : f32 to vector<1x128xf32>
      %67 = arith.addf %63, %66 : vector<1x128xf32>
      %68 = math.rsqrt %67 : vector<1x128xf32>
      %69 = vector.broadcast %68 : vector<1x128xf32> to vector<2x128xf32>
      %70 = arith.mulf %65, %69 : vector<2x128xf32>
      %c0_32 = arith.constant 0 : index
      %c0_33 = arith.constant 0 : index
      %71 = vector.load %arg7[%c0_32, %c0_33] : memref<1x128xf32, #tpu.memory_space<vmem>>, vector<1x128xf32>
      %72 = vector.broadcast %71 : vector<1x128xf32> to vector<2x128xf32>
      %73 = arith.mulf %70, %72 : vector<2x128xf32>
      %c0_34 = arith.constant 0 : index
      %c0_35 = arith.constant 0 : index
      %74 = vector.load %arg8[%c0_34, %c0_35] : memref<1x128xf32, #tpu.memory_space<vmem>>, vector<1x128xf32>
      %75 = vector.broadcast %74 : vector<1x128xf32> to vector<2x128xf32>
      %76 = arith.addf %73, %75 : vector<2x128xf32>
      %77 = math.absf %76 : vector<2x128xf32>
      %c0_36 = arith.constant 0 : index
      %c0_37 = arith.constant 0 : index
      %78 = vector.load %arg9[%c0_36, %c0_37] : memref<1x128xf32, #tpu.memory_space<vmem>>, vector<1x128xf32>
      %79 = vector.broadcast %78 : vector<1x128xf32> to vector<2x128xf32>
      %80 = arith.addf %77, %79 : vector<2x128xf32>
      %cst_38 = arith.constant 0.000000e+00 : f32
      %81 = vector.broadcast %cst_38 : f32 to vector<2x128xf32>
      %82 = arith.maximumf %80, %81 : vector<2x128xf32>
      %c0_39 = arith.constant 0 : index
      %c0_40 = arith.constant 0 : index
      %83 = vector.load %arg10[%c0_39, %c0_40] : memref<2x128xf32, #tpu.memory_space<vmem>>, vector<2x128xf32>
      tpu.vector_store %arg10[%c0_39, %c0_40], %82 {strides = array<i32>} : memref<2x128xf32, #tpu.memory_space<vmem>>, vector<2x128xf32>,
    } else {
    }
    return
  }
  func.func @transform_0(%arg0: i32) -> (i32, i32) {
    %c0_i32 = arith.constant 0 : i32
    %c0_i32_0 = arith.constant 0 : i32
    return %c0_i32, %arg0 : i32, i32
  }
  func.func @transform_1(%arg0: i32) -> (i32, i32) {
    %c0_i32 = arith.constant 0 : i32
    %c0_i32_0 = arith.constant 0 : i32
    return %arg0, %c0_i32 : i32, i32
  }
  func.func @transform_2(%arg0: i32) -> (i32, i32) {
    %c0_i32 = arith.constant 0 : i32
    %c0_i32_0 = arith.constant 0 : i32
    return %c0_i32, %arg0 : i32, i32
  }
  func.func @transform_3(%arg0: i32) -> (i32, i32) {
    %c0_i32 = arith.constant 0 : i32
    %c0_i32_0 = arith.constant 0 : i32
    %c0_i32_1 = arith.constant 0 : i32
    return %c0_i32, %c0_i32_0 : i32, i32
  }
  func.func @transform_4(%arg0: i32) -> (i32, i32) {
    %c0_i32 = arith.constant 0 : i32
    %c0_i32_0 = arith.constant 0 : i32
    %c0_i32_1 = arith.constant 0 : i32
    return %c0_i32, %c0_i32_0 : i32, i32
  }
  func.func @transform_5(%arg0: i32) -> (i32, i32) {
    %c0_i32 = arith.constant 0 : i32
    %c0_i32_0 = arith.constant 0 : i32
    %c0_i32_1 = arith.constant 0 : i32
    return %c0_i32, %c0_i32_0 : i32, i32
  }
  func.func @transform_6(%arg0: i32) -> (i32, i32) {
    %c0_i32 = arith.constant 0 : i32
    %c0_i32_0 = arith.constant 0 : i32
    %c0_i32_1 = arith.constant 0 : i32
    return %c0_i32, %c0_i32_0 : i32, i32
  }
  func.func @transform_7(%arg0: i32) -> (i32, i32) {
    %c0_i32 = arith.constant 0 : i32
    %c0_i32_0 = arith.constant 0 : i32
    %c0_i32_1 = arith.constant 0 : i32
    return %c0_i32, %c0_i32_0 : i32, i32
  }
  func.func @transform_8(%arg0: i32) -> (i32, i32) {
    %c0_i32 = arith.constant 0 : i32
    %c0_i32_0 = arith.constant 0 : i32
    %c0_i32_1 = arith.constant 0 : i32
    return %c0_i32, %c0_i32_0 : i32, i32
  }
  func.func @transform_9(%arg0: i32) -> (i32, i32) {
    %c0_i32 = arith.constant 0 : i32
    %c0_i32_0 = arith.constant 0 : i32
    %c0_i32_1 = arith.constant 0 : i32
    return %c0_i32, %c0_i32_0 : i32, i32
  }
}

</mosaic_0001>

<llo_original>
// kernel: tpu_custom_call.1
$region0: #{tpu_custom_call.1}
  #allocation0 [shape = 'u32[]', space=smem, size = 0x4, offset = 0x4, fixed_abs, tag = 'smem constant byte address 0x4 - core index']
  #allocation1 [shape = 'u32[144,128]{1,0:T(1,128)}', space=vmem, size = 0x12000, scoped, tag = 'internal scratch']
  #allocation2 [shape = 'f32[2,12]{1,0:T(2,128)}', space=vmem, size = 0x400, scoped, tag = 'scratch operand']
  %s0 = inlined_call_operand.vmem [shape: f32[3,128], index: 0, kind: input, shape index: {}]
  %s1 = inlined_call_operand.vmem [shape: bf16[128,4], index: 1, kind: input, shape index: {}]
  %s2 = inlined_call_operand.vmem [shape: s32[1,128], index: 2, kind: input, shape index: {}]
  %s3 = inlined_call_operand.vmem [shape: f32[3,2], index: 3, kind: input, shape index: {}]
  %s4 = inlined_call_operand.vmem [shape: f32[3,1], index: 4, kind: input, shape index: {}]
  %s5 = inlined_call_operand.vmem [shape: f32[12,128], index: 5, kind: input, shape index: {}]
  %s6 = inlined_call_operand.vmem [shape: f32[1,128], index: 6, kind: input, shape index: {}]
  %s7 = inlined_call_operand.vmem [shape: f32[1,128], index: 7, kind: input, shape index: {}]
  %s8 = inlined_call_operand.vmem [shape: f32[1,128], index: 8, kind: input, shape index: {}]
  %s9 = inlined_call_operand.hbm [shape: f32[2,128], index: 9, kind: output, shape index: {}]
  %s10 = sld [smem:[#allocation0]]
  $region54: #{tpu_custom_call.1} parent=0
    _
  %s12 = ssub.s32 1, %s10
  %s13 = scalar_select 0, %s12, %s10
  $region1: #{tpu_custom_call.1} parent=0
    #allocation3 [shape = 'u8[1024]{0}', space=vmem, size = 0x400, scoped, tag = 'output window, operand 0, single buffered']
    #allocation4 [shape = 's32[1]{0}', space=sflag, size = 0x4, scoped, tag = 'scoped memory for tpu_custom_call.1']
    %14 = vsyncpa [#allocation4], 0
    // Predicated region
    $region2: #{tpu_custom_call.1} parent=1 // pred_check
      _
    $region3: #{tpu_custom_call.1} parent=1 // pred_check_branch
      %16 = sbr.rel (0) target = $region5
    $region4: #{tpu_custom_call.1} parent=1 // pred_region
      _
    $region5: #{tpu_custom_call.1} parent=1 // pred_fallthru
      _
    // Predicated region
    $region6: #{tpu_custom_call.1} parent=1 // pred_check
      _
    $region7: #{tpu_custom_call.1} parent=1 // pred_check_branch
      %18 = sbr.rel (0) target = $region9
    $region8: #{tpu_custom_call.1} parent=1 // pred_region
      _
    $region9: #{tpu_custom_call.1} parent=1 // pred_fallthru
      _
    // Predicated region
    $region10: #{tpu_custom_call.1} parent=1 // pred_check
      _
    $region11: #{tpu_custom_call.1} parent=1 // pred_check_branch
      %20 = sbr.rel (0) target = $region13
    $region12: #{tpu_custom_call.1} parent=1 // pred_region
      _
    $region13: #{tpu_custom_call.1} parent=1 // pred_fallthru
      _
    // Predicated region
    $region14: #{tpu_custom_call.1} parent=1 // pred_check
      _
    $region15: #{tpu_custom_call.1} parent=1 // pred_check_branch
      %22 = sbr.rel (0) target = $region17
    $region16: #{tpu_custom_call.1} parent=1 // pred_region
      _
    $region17: #{tpu_custom_call.1} parent=1 // pred_fallthru
      _
    // Predicated region
    $region18: #{tpu_custom_call.1} parent=1 // pred_check
      _
    $region19: #{tpu_custom_call.1} parent=1 // pred_check_branch
      %24 = sbr.rel (0) target = $region21
    $region20: #{tpu_custom_call.1} parent=1 // pred_region
      _
    $region21: #{tpu_custom_call.1} parent=1 // pred_fallthru
      _
    // Predicated region
    $region22: #{tpu_custom_call.1} parent=1 // pred_check
      _
    $region23: #{tpu_custom_call.1} parent=1 // pred_check_branch
      %26 = sbr.rel (0) target = $region25
    $region24: #{tpu_custom_call.1} parent=1 // pred_region
      _
    $region25: #{tpu_custom_call.1} parent=1 // pred_fallthru
      _
    // Predicated region
    $region26: #{tpu_custom_call.1} parent=1 // pred_check
      _
    $region27: #{tpu_custom_call.1} parent=1 // pred_check_branch
      %28 = sbr.rel (0) target = $region29
    $region28: #{tpu_custom_call.1} parent=1 // pred_region
      _
    $region29: #{tpu_custom_call.1} parent=1 // pred_fallthru
      _
    // Predicated region
    $region30: #{tpu_custom_call.1} parent=1 // pred_check
      _
    $region31: #{tpu_custom_call.1} parent=1 // pred_check_branch
      %30 = sbr.rel (0) target = $region33
    $region32: #{tpu_custom_call.1} parent=1 // pred_region
      _
    $region33: #{tpu_custom_call.1} parent=1 // pred_fallthru
      _
    // Predicated region
    $region34: #{tpu_custom_call.1} parent=1 // pred_check
      _
    $region35: #{tpu_custom_call.1} parent=1 // pred_check_branch
      %32 = sbr.rel (0) target = $region37
    $region36: #{tpu_custom_call.1} parent=1 // pred_region
      _
    $region37: #{tpu_custom_call.1} parent=1 // pred_fallthru
      _
    %p34 = scmp.eq.s32.totalorder 0, 0
    // Predicated region
    $region38: #{tpu_custom_call.1} parent=1 // pred_check
      %p35 = pneg %p34
    $region39: #{tpu_custom_call.1} parent=1 // pred_check_branch
      %37 = sbr.rel (%p35) target = $region41
    $region40: #{tpu_custom_call.1} parent=1 // pred_region
      %vm38 = vcmask 91136
      %39 = vst.msk [vmem:[#allocation2] sm:$0x3] %vm38, 0.0
    $region41: #{tpu_custom_call.1} parent=1 // pred_fallthru
      _
    %v40 = vld [vmem:[%s0] sm:$0x7]
    %v41 = vld [vmem:[%s2] sm:$0x1]
    %v42 = vlaneseq
    %v43 = vshrl.u32 %v42, 7
    %v44 = vlaneseq
    %v45 = vshrl.u32 %v44, 7
    %v46 = vsub.s32 0, %v45
    %v47 = vrot.slane %v41, %v46
    %vm48 = vcmp.eq.s32.totalorder %v43, %v47
    %v49 = vsel %vm48, 1, 0
    %v50 = vcvt.s32.f32 %v49
    %v51 = vld [vmem:[%s3] sm:$0x7]
    %vm52 = vcmask 15360
    %v54 = vsel %vm52, %v51, 0
    %vm56 = vcmask 1041408
    %v58 = vsel %vm56, %v50, 0
    %60 = vmatprep.subr.mxu0 0.0
    %61 = vmatpush1.msra.mxu0 %v58
    %62 = vmatprep.subr.mxu0 0.0
    %63 = vmatpush1.msra.mxu0 0.0
    %64 = vmatprep.subr.mxu0 0.0
    %65 = vmatpush1.msra.mxu0 0.0
    %66 = vmatprep.subr.mxu0 0.0
    %67 = vmatpush1.msra.mxu0 0.0
    %68 = vmatprep.subr.mxu0 0.0
    %69 = vmatpush1.msra.mxu0 0.0
    %70 = vmatprep.subr.mxu0 0.0
    %71 = vmatpush1.msra.mxu0 0.0
    %72 = vmatprep.subr.mxu0 0.0
    %73 = vmatpush1.msra.mxu0 0.0
    %74 = vmatprep.subr.mxu0 0.0
    %75 = vmatpush1.msra.mxu0 0.0
    %76 = vmatprep.subr.mxu0 0.0
    %77 = vmatpush1.msra.mxu0 0.0
    %78 = vmatprep.subr.mxu0 0.0
    %79 = vmatpush1.msra.mxu0 0.0
    %80 = vmatprep.subr.mxu0 0.0
    %81 = vmatpush1.msra.mxu0 0.0
    %82 = vmatprep.subr.mxu0 0.0
    %83 = vmatpush1.msra.mxu0 0.0
    %84 = vmatprep.subr.mxu0 0.0
    %85 = vmatpush1.msra.mxu0 0.0
    %86 = vmatprep.subr.mxu0 0.0
    %87 = vmatpush1.msra.mxu0 0.0
    %88 = vmatprep.subr.mxu0 0.0
    %89 = vmatpush1.msra.mxu0 0.0
    %90 = vmatprep.subr.mxu0 0.0
    %91 = vmatpush1.msra.mxu0 0.0
    %92 = vmatprep.subr.mxu0 0.0
    %93 = vmatpush1.msra.mxu0 0.0
    %94 = vmatprep.subr.mxu0 0.0
    %95 = vmatpush1.msra.mxu0 0.0
    %96 = vmatprep.subr.mxu0 0.0
    %97 = vmatpush1.msra.mxu0 0.0
    %98 = vmatprep.subr.mxu0 0.0
    %99 = vmatpush1.msra.mxu0 0.0
    %100 = vmatprep.subr.mxu0 0.0
    %101 = vmatpush1.msra.mxu0 0.0
    %102 = vmatprep.subr.mxu0 0.0
    %103 = vmatpush1.msra.mxu0 0.0
    %104 = vmatprep.subr.mxu0 0.0
    %105 = vmatpush1.msra.mxu0 0.0
    %106 = vmatprep.subr.mxu0 0.0
    %107 = vmatpush1.msra.mxu0 0.0
    %108 = vmatprep.subr.mxu0 0.0
    %109 = vmatpush1.msra.mxu0 0.0
    %110 = vmatprep.subr.mxu0 0.0
    %111 = vmatpush1.msra.mxu0 0.0
    %112 = vmatprep.subr.mxu0 0.0
    %113 = vmatpush1.msra.mxu0 0.0
    %114 = vmatprep.subr.mxu0 0.0
    %115 = vmatpush1.msra.mxu0 0.0
    %116 = vmatprep.subr.mxu0 0.0
    %117 = vmatpush1.msra.mxu0 0.0
    %118 = vmatprep.subr.mxu0 0.0
    %119 = vmatpush1.msra.mxu0 0.0
    %120 = vmatprep.subr.mxu0 0.0
    %121 = vmatpush1.msra.mxu0 0.0
    %122 = vmatprep.subr.mxu0 0.0
    %123 = vmatpush1.msra.mxu0 0.0
    %124 = vmatprep.mubr.f32.mxu0 0.0
    %125 = vmatmul.mubr.f32.gmra.mrb[0].mxu0 %v54
    %v126 = vpop.f32.mrb[0].mxu0
    %v127 = vadd.f32 0.0, %v126
    %v128 = vpop.f32.mrb[0].mxu0
    %129 = vdwg.mxu0
    %v130 = vsub.f32 %v40, %v127
    %v131 = vmul.f32 %v130, %v130
    %vm132 = vcmask 1042432
    %v133 = vsel %vm132, %v131, 0.0
    %v134 = vrot.slane %v133, 4
    %v135 = vadd.f32 %v133, %v134
    %v136 = vrot.slane %v135, 2
    %v137 = vadd.f32 %v135, %v136
    %v138 = vrot.slane %v137, 1
    %v139 = vadd.f32 %v137, %v138
    %v140 = vrsqrt.pop %v139
    %v141 = vmul.f32 %v139, %v140
    %vm142 = vcmp.eq.f32.partialorder %v139, inf
    %v143 = vsel %vm142, %v139, %v141
    %vm144 = vcmp.eq.f32.partialorder %v139, 0.0
    %v145 = vand.u32 %v139, 2147483648
    %v146 = vsel %vm144, %v145, %v143
    %v147 = vld [vmem:[%s4] sm:$0x7]
    %149 = vset.pattern.permute.xlu0 0
    %150 = vperm.xlu0 %149, %v147
    %v151 = vpop.permute.xlu0 %150
    %v153 = vsub.f32 %v146, %v151
    %v154 = vmul.f32 %v153, %v153
    %v155 = vsub.f32 0.0, %v154
    %v156 = vmul.f32 %v155, 1.125
    %v157 = vmul.f32 %v156, 1.442695
    %v158 = vpow.pop %v157
    %v159 = vld [vmem:[%s1] sm:$0xf]
    %v160 = vld [vmem:[%s1 + $0x4] sm:$0xf]
    %v161 = vld [vmem:[%s1 + $0x8] sm:$0xf]
    %v162 = vld [vmem:[%s1 + $0xc] sm:$0xf]
    %v163 = vld [vmem:[%s1 + $0x10] sm:$0xf]
    %v164 = vld [vmem:[%s1 + $0x14] sm:$0xf]
    %v165 = vld [vmem:[%s1 + $0x18] sm:$0xf]
    %v166 = vld [vmem:[%s1 + $0x1c] sm:$0xf]
    %v167 = vld [vmem:[%s1 + $0x20] sm:$0xf]
    %v168 = vld [vmem:[%s1 + $0x24] sm:$0xf]
    %v169 = vld [vmem:[%s1 + $0x28] sm:$0xf]
    %v170 = vld [vmem:[%s1 + $0x2c] sm:$0xf]
    %v171 = vld [vmem:[%s1 + $0x30] sm:$0xf]
    %v172 = vld [vmem:[%s1 + $0x34] sm:$0xf]
    %v173 = vld [vmem:[%s1 + $0x38] sm:$0xf]
    %v174 = vld [vmem:[%s1 + $0x3c] sm:$0xf]
    %v175 = vlaneseq
    %v176 = vshrl.u32 %v175, 7
    %v177 = vsub.s32 0, %v176
    %v178 = vrot.slane %v158, %v177
    %v179 = vmul.f32 %v178, %v50
    %v180 = vpack.c.bf16 %v179, %v179
    %v197 = vunpack.c.l.b16 %v159
    %v198 = vunpack.c.l.b16 %v160
    %v199 = vunpack.c.l.b16 %v161
    %v200 = vunpack.c.l.b16 %v162
    %v201 = vunpack.c.l.b16 %v163
    %v202 = vunpack.c.l.b16 %v164
    %v203 = vunpack.c.l.b16 %v165
    %v204 = vunpack.c.l.b16 %v166
    %v205 = vunpack.c.l.b16 %v167
    %v206 = vunpack.c.l.b16 %v168
    %v207 = vunpack.c.l.b16 %v169
    %v208 = vunpack.c.l.b16 %v170
    %v209 = vunpack.c.l.b16 %v171
    %v210 = vunpack.c.l.b16 %v172
    %v211 = vunpack.c.l.b16 %v173
    %v212 = vunpack.c.l.b16 %v174
    %v213 = vpack.c.b16 %v198, %v197
    %v214 = vpack.c.b16 %v200, %v199
    %v215 = vpack.c.b16 %v202, %v201
    %v216 = vpack.c.b16 %v204, %v203
    %v217 = vpack.c.b16 %v206, %v205
    %v218 = vpack.c.b16 %v208, %v207
    %v219 = vpack.c.b16 %v210, %v209
    %v220 = vpack.c.b16 %v212, %v211
    %229 = vmatprep.subr.bf16.mxu0 0
    %230 = vmatpush1.bf16.msra.mxu0 %v213
    %231 = vmatprep.subr.bf16.mxu0 0
    %232 = vmatpush1.bf16.msra.mxu0 %v214
    %233 = vmatprep.subr.bf16.mxu0 0
    %234 = vmatpush1.bf16.msra.mxu0 %v215
    %235 = vmatprep.subr.bf16.mxu0 0
    %236 = vmatpush1.bf16.msra.mxu0 %v216
    %237 = vmatprep.subr.bf16.mxu0 0
    %238 = vmatpush1.bf16.msra.mxu0 %v217
    %239 = vmatprep.subr.bf16.mxu0 0
    %240 = vmatpush1.bf16.msra.mxu0 %v218
    %241 = vmatprep.subr.bf16.mxu0 0
    %242 = vmatpush1.bf16.msra.mxu0 %v219
    %243 = vmatprep.subr.bf16.mxu0 0
    %244 = vmatpush1.bf16.msra.mxu0 %v220
    %245 = vmatprep.subr.bf16.mxu0 0
    %246 = vmatpush1.bf16.msra.mxu0 0
    %247 = vmatprep.subr.bf16.mxu0 0
    %248 = vmatpush1.bf16.msra.mxu0 0
    %249 = vmatprep.subr.bf16.mxu0 0
    %250 = vmatpush1.bf16.msra.mxu0 0
    %251 = vmatprep.subr.bf16.mxu0 0
    %252 = vmatpush1.bf16.msra.mxu0 0
    %253 = vmatprep.subr.bf16.mxu0 0
    %254 = vmatpush1.bf16.msra.mxu0 0
    %255 = vmatprep.subr.bf16.mxu0 0
    %256 = vmatpush1.bf16.msra.mxu0 0
    %257 = vmatprep.subr.bf16.mxu0 0
    %258 = vmatpush1.bf16.msra.mxu0 0
    %259 = vmatprep.subr.bf16.mxu0 0
    %260 = vmatpush1.bf16.msra.mxu0 0
    %261 = vmatprep.mubr.bf16.mxu0 0
    %262 = vmatmul.mubr.bf16.gmra.mrb[0].mxu0 %v180
    %v263 = vpop.f32.mrb[0].mxu0
    %v264 = vadd.f32 0.0, %v263
    %v265 = vpop.f32.mrb[0].mxu0
    %v266 = vpop.f32.mrb[0].mxu0
    %v267 = vpop.f32.mrb[0].mxu0
    %268 = vdwg.mxu0
    %v269 = vlaneseq
    %v270 = vshrl.u32 %v269, 7
    %v271 = vsub.s32 1, %v270
    %v272 = vrot.slane %v158, %v271
    %v273 = vmul.f32 %v272, %v50
    %v274 = vpack.c.bf16 %v273, %v273
    %275 = vmatprep.subr.bf16.mxu0 0
    %276 = vmatpush1.bf16.msra.mxu0 %v213
    %277 = vmatprep.subr.bf16.mxu0 0
    %278 = vmatpush1.bf16.msra.mxu0 %v214
    %279 = vmatprep.subr.bf16.mxu0 0
    %280 = vmatpush1.bf16.msra.mxu0 %v215
    %281 = vmatprep.subr.bf16.mxu0 0
    %282 = vmatpush1.bf16.msra.mxu0 %v216
    %283 = vmatprep.subr.bf16.mxu0 0
    %284 = vmatpush1.bf16.msra.mxu0 %v217
    %285 = vmatprep.subr.bf16.mxu0 0
    %286 = vmatpush1.bf16.msra.mxu0 %v218
    %287 = vmatprep.subr.bf16.mxu0 0
    %288 = vmatpush1.bf16.msra.mxu0 %v219
    %289 = vmatprep.subr.bf16.mxu0 0
    %290 = vmatpush1.bf16.msra.mxu0 %v220
    %291 = vmatprep.subr.bf16.mxu0 0
    %292 = vmatpush1.bf16.msra.mxu0 0
    %293 = vmatprep.subr.bf16.mxu0 0
    %294 = vmatpush1.bf16.msra.mxu0 0
    %295 = vmatprep.subr.bf16.mxu0 0
    %296 = vmatpush1.bf16.msra.mxu0 0
    %297 = vmatprep.subr.bf16.mxu0 0
    %298 = vmatpush1.bf16.msra.mxu0 0
    %299 = vmatprep.subr.bf16.mxu0 0
    %300 = vmatpush1.bf16.msra.mxu0 0
    %301 = vmatprep.subr.bf16.mxu0 0
    %302 = vmatpush1.bf16.msra.mxu0 0
    %303 = vmatprep.subr.bf16.mxu0 0
    %304 = vmatpush1.bf16.msra.mxu0 0
    %305 = vmatprep.subr.bf16.mxu0 0
    %306 = vmatpush1.bf16.msra.mxu0 0
    %307 = vmatprep.mubr.bf16.mxu0 0
    %308 = vmatmul.mubr.bf16.gmra.mrb[0].mxu0 %v274
    %v309 = vpop.f32.mrb[0].mxu0
    %v310 = vadd.f32 0.0, %v309
    %v311 = vpop.f32.mrb[0].mxu0
    %v312 = vpop.f32.mrb[0].mxu0
    %v313 = vpop.f32.mrb[0].mxu0
    %314 = vdwg.mxu0
    %v315 = vlaneseq
    %v316 = vshrl.u32 %v315, 7
    %v317 = vsub.s32 2, %v316
    %v318 = vrot.slane %v158, %v317
    %v319 = vmul.f32 %v318, %v50
    %v320 = vpack.c.bf16 %v319, %v319
    %321 = vmatprep.subr.bf16.mxu0 0
    %322 = vmatpush1.bf16.msra.mxu0 %v213
    %323 = vmatprep.subr.bf16.mxu0 0
    %324 = vmatpush1.bf16.msra.mxu0 %v214
    %325 = vmatprep.subr.bf16.mxu0 0
    %326 = vmatpush1.bf16.msra.mxu0 %v215
    %327 = vmatprep.subr.bf16.mxu0 0
    %328 = vmatpush1.bf16.msra.mxu0 %v216
    %329 = vmatprep.subr.bf16.mxu0 0
    %330 = vmatpush1.bf16.msra.mxu0 %v217
    %331 = vmatprep.subr.bf16.mxu0 0
    %332 = vmatpush1.bf16.msra.mxu0 %v218
    %333 = vmatprep.subr.bf16.mxu0 0
    %334 = vmatpush1.bf16.msra.mxu0 %v219
    %335 = vmatprep.subr.bf16.mxu0 0
    %336 = vmatpush1.bf16.msra.mxu0 %v220
    %337 = vmatprep.subr.bf16.mxu0 0
    %338 = vmatpush1.bf16.msra.mxu0 0
    %339 = vmatprep.subr.bf16.mxu0 0
    %340 = vmatpush1.bf16.msra.mxu0 0
    %341 = vmatprep.subr.bf16.mxu0 0
    %342 = vmatpush1.bf16.msra.mxu0 0
    %343 = vmatprep.subr.bf16.mxu0 0
    %344 = vmatpush1.bf16.msra.mxu0 0
    %345 = vmatprep.subr.bf16.mxu0 0
    %346 = vmatpush1.bf16.msra.mxu0 0
    %347 = vmatprep.subr.bf16.mxu0 0
    %348 = vmatpush1.bf16.msra.mxu0 0
    %349 = vmatprep.subr.bf16.mxu0 0
    %350 = vmatpush1.bf16.msra.mxu0 0
    %351 = vmatprep.subr.bf16.mxu0 0
    %352 = vmatpush1.bf16.msra.mxu0 0
    %353 = vmatprep.mubr.bf16.mxu0 0
    %354 = vmatmul.mubr.bf16.gmra.mrb[0].mxu0 %v320
    %v355 = vpop.f32.mrb[0].mxu0
    %v356 = vadd.f32 0.0, %v355
    %v357 = vpop.f32.mrb[0].mxu0
    %v358 = vpop.f32.mrb[0].mxu0
    %v359 = vpop.f32.mrb[0].mxu0
    %360 = vdwg.mxu0
    %v361 = vld [vmem:[#allocation2] sm:$0x3]
    %363 = vrot.lane.b32.xlu0 %v310, 4
    %v364 = vpop.permute.xlu0 %363
    %367 = vrot.lane.b32.xlu0 %v356, 8
    %v368 = vpop.permute.xlu0 %367
    %vm370 = vcmask 31744
    %v371 = vsel %vm370, %v264, %v364
    %vm372 = vcmask 64512
    %v373 = vsel %vm372, %v371, %v368
    %v374 = vadd.f32 %v361, %v373
    %vm375 = vcmask 91136
    %376 = vst.msk [vmem:[#allocation2] sm:$0x3] %vm375, %v374
    // Predicated region
    $region42: #{tpu_custom_call.1} parent=1 // pred_check
      %p377 = pneg %p34
    $region43: #{tpu_custom_call.1} parent=1 // pred_check_branch
      %379 = sbr.rel (%p377) target = $region45
    $region44: #{tpu_custom_call.1} parent=1 // pred_region
      %v380 = vld [vmem:[#allocation2] sm:$0x3]
      %v381 = vld [vmem:[%s5] sm:$0xff]
      %v382 = vld [vmem:[%s5 + $0x8] sm:$0xf]
      %vm383 = vcmask 97280
      %v385 = vsel %vm383, %v380, 0
      %vm387 = vcmask 1043456
      %v389 = vsel %vm387, %v382, 0
      %391 = vmatprep.subr.mxu0 0.0
      %392 = vmatpush1.msra.mxu0 %v381
      %393 = vmatprep.subr.mxu0 0.0
      %394 = vmatpush1.msra.mxu0 %v389
      %395 = vmatprep.subr.mxu0 0.0
      %396 = vmatpush1.msra.mxu0 0.0
      %397 = vmatprep.subr.mxu0 0.0
      %398 = vmatpush1.msra.mxu0 0.0
      %399 = vmatprep.subr.mxu0 0.0
      %400 = vmatpush1.msra.mxu0 0.0
      %401 = vmatprep.subr.mxu0 0.0
      %402 = vmatpush1.msra.mxu0 0.0
      %403 = vmatprep.subr.mxu0 0.0
      %404 = vmatpush1.msra.mxu0 0.0
      %405 = vmatprep.subr.mxu0 0.0
      %406 = vmatpush1.msra.mxu0 0.0
      %407 = vmatprep.subr.mxu0 0.0
      %408 = vmatpush1.msra.mxu0 0.0
      %409 = vmatprep.subr.mxu0 0.0
      %410 = vmatpush1.msra.mxu0 0.0
      %411 = vmatprep.subr.mxu0 0.0
      %412 = vmatpush1.msra.mxu0 0.0
      %413 = vmatprep.subr.mxu0 0.0
      %414 = vmatpush1.msra.mxu0 0.0
      %415 = vmatprep.subr.mxu0 0.0
      %416 = vmatpush1.msra.mxu0 0.0
      %417 = vmatprep.subr.mxu0 0.0
      %418 = vmatpush1.msra.mxu0 0.0
      %419 = vmatprep.subr.mxu0 0.0
      %420 = vmatpush1.msra.mxu0 0.0
      %421 = vmatprep.subr.mxu0 0.0
      %422 = vmatpush1.msra.mxu0 0.0
      %423 = vmatprep.subr.mxu0 0.0
      %424 = vmatpush1.msra.mxu0 0.0
      %425 = vmatprep.subr.mxu0 0.0
      %426 = vmatpush1.msra.mxu0 0.0
      %427 = vmatprep.subr.mxu0 0.0
      %428 = vmatpush1.msra.mxu0 0.0
      %429 = vmatprep.subr.mxu0 0.0
      %430 = vmatpush1.msra.mxu0 0.0
      %431 = vmatprep.subr.mxu0 0.0
      %432 = vmatpush1.msra.mxu0 0.0
      %433 = vmatprep.subr.mxu0 0.0
      %434 = vmatpush1.msra.mxu0 0.0
      %435 = vmatprep.subr.mxu0 0.0
      %436 = vmatpush1.msra.mxu0 0.0
      %437 = vmatprep.subr.mxu0 0.0
      %438 = vmatpush1.msra.mxu0 0.0
      %439 = vmatprep.subr.mxu0 0.0
      %440 = vmatpush1.msra.mxu0 0.0
      %441 = vmatprep.subr.mxu0 0.0
      %442 = vmatpush1.msra.mxu0 0.0
      %443 = vmatprep.subr.mxu0 0.0
      %444 = vmatpush1.msra.mxu0 0.0
      %445 = vmatprep.subr.mxu0 0.0
      %446 = vmatpush1.msra.mxu0 0.0
      %447 = vmatprep.subr.mxu0 0.0
      %448 = vmatpush1.msra.mxu0 0.0
      %449 = vmatprep.subr.mxu0 0.0
      %450 = vmatpush1.msra.mxu0 0.0
      %451 = vmatprep.subr.mxu0 0.0
      %452 = vmatpush1.msra.mxu0 0.0
      %453 = vmatprep.subr.mxu0 0.0
      %454 = vmatpush1.msra.mxu0 0.0
      %455 = vmatprep.mubr.f32.mxu0 0.0
      %456 = vmatmul.mubr.f32.gmra.mrb[0].mxu0 %v385
      %v457 = vpop.f32.mrb[0].mxu0
      %v458 = vadd.f32 0.0, %v457
      %v459 = vpop.f32.mrb[0].mxu0
      %460 = vdwg.mxu0
      %v461 = vsel %vm56, %v458, 0.0
      %v462 = vrot.slane %v461, 4
      %v463 = vadd.f32 %v461, %v462
      %v464 = vrot.slane %v463, 2
      %v465 = vadd.f32 %v463, %v464
      %v466 = vrot.slane %v465, 1
      %v467 = vadd.f32 %v465, %v466
      %v468 = vrcp.pop 2.0
      %v469 = vmul.f32 %v467, %v468
      %v470 = vsub.f32 %v458, %v469
      %v471 = vmul.f32 %v470, %v470
      %v472 = vsel %vm56, %v471, 0.0
      %v473 = vrot.slane %v472, 4
      %v474 = vadd.f32 %v472, %v473
      %v475 = vrot.slane %v474, 2
      %v476 = vadd.f32 %v474, %v475
      %v477 = vrot.slane %v476, 1
      %v478 = vadd.f32 %v476, %v477
      %v479 = vmul.f32 %v478, %v468
      %v480 = vadd.f32 %v479, 1e-05
      %v481 = vrsqrt.pop %v480
      %v482 = vmul.f32 %v470, %v481
      %v483 = vld [vmem:[%s6] sm:$0x1]
      %v485 = vlaneseq
      %v486 = vshrl.u32 %v485, 7
      %v487 = vsub.s32 0, %v486
      %v488 = vrot.slane %v483, %v487
      %v490 = vmul.f32 %v482, %v488
      %v491 = vld [vmem:[%s7] sm:$0x1]
      %v493 = vlaneseq
      %v494 = vshrl.u32 %v493, 7
      %v495 = vsub.s32 0, %v494
      %v496 = vrot.slane %v491, %v495
      %v498 = vadd.f32 %v490, %v496
      %v499 = vand.u32 2147483647, %v498
      %v500 = vld [vmem:[%s8] sm:$0x1]
      %v502 = vlaneseq
      %v503 = vshrl.u32 %v502, 7
      %v504 = vsub.s32 0, %v503
      %v505 = vrot.slane %v500, %v504
      %v507 = vadd.f32 %v499, %v505
      %v508 = vmax.f32 %v507, 0.0
      %509 = vst [vmem:[#allocation3] sm:$0x3] %v508
    $region45: #{tpu_custom_call.1} parent=1 // pred_fallthru
      _
    // Predicated region
    $region46: #{tpu_custom_call.1} parent=1 // pred_check
      _
    $region47: #{tpu_custom_call.1} parent=1 // pred_check_branch
      %511 = sbr.rel (0) target = $region49
    $region48: #{tpu_custom_call.1} parent=1 // pred_region
      %s513 = ssub.s32 32, 32
      %514 = vsyncadd [#allocation4], %s513
      %s516 = sshll.u32 [#allocation3], 4
      %s517 = int_to_ptr.vmem [resolvable:$true] %s516
      %519 = dma.vmem_to_hbm [thread:$0]  %s517, 32, %s9, [#allocation4]
    $region49: #{tpu_custom_call.1} parent=1 // pred_fallthru
      _
    // Predicated region
    $region50: #{tpu_custom_call.1} parent=1 // pred_check
      _
    $region51: #{tpu_custom_call.1} parent=1 // pred_check_branch
      %521 = sbr.rel (0) target = $region53
    $region52: #{tpu_custom_call.1} parent=1 // pred_region
      %522 = dma.done [#allocation4], 32
    $region53: #{tpu_custom_call.1} parent=1 // pred_fallthru
      _
    %523 = vsyncpa [#allocation4], 1

</llo_original>
